<compile_context>
chip_gen: v7x
topology: tpu7x:2x2x1
jax: 0.10.0
libtpu: 0.0.40
codegen_flags: <defaults>
</compile_context>

<pallas_src>
import jax
import jax.numpy as jnp
from jax.experimental import pallas as pl
from jax.experimental.pallas import tpu as pltpu


def _round_up(x: int, m: int) -> int:
    return ((x + m - 1) // m) * m


def ca_forward_kernel(v_ref, beta_ref, out_ref):
    # v_ref    : (1, Ppad)   collapsed weight row (bias folded in)
    # beta_ref : (TN, Ppad)  beta tile with appended ones column
    # out_ref  : (1, TN)     lane-dense output slab
    # Contract the last (lane) dim of both operands: (1,P) x (TN,P)^T -> (1,TN),
    # a single MXU matmul with transposed RHS — no cross-lane reduce, no relayout.
    out_ref[...] = jax.lax.dot_general(
        v_ref[...],
        beta_ref[...],
        dimension_numbers=(((1,), (1,)), ((), ())),
        preferred_element_type=jnp.float32,
    ).astype(out_ref.dtype)


def ca_base_forward(beta_input, factor_input, wb, bb, wf, bf, *, tile_n=512):
    N, P = beta_input.shape
    Pk, K = wb.shape
    assert Pk == P and factor_input.shape == (1, P)
    assert bb.shape == (1, K) and wf.shape == (P, K) and bf.shape == (1, K)

    f32 = jnp.float32

    # ---- algebraic collapse of the factor branch (tiny, done once) ----
    f = factor_input.astype(f32) @ wf.astype(f32) + bf.astype(f32)       # (1, K)
    v = wb.astype(f32) @ f[0]                                            # (P,)
    c = bb.astype(f32) @ f[0]                                            # (1,)  scalar bias term

    # ---- pad P (+1 for the folded bias column) to a full 128-lane row ----
    Ppad = _round_up(P + 1, 128)
    v_row = jnp.zeros((1, Ppad), f32).at[0, : P + 1].set(jnp.concatenate([v, c]))

    # ---- tile selection: multiple of 128 (lane-dense out), large to amortize
    # per-step pipeline overhead, but >= 2 grid steps when N allows (v7x 2 TCs) ----
    tn = min(int(tile_n), max(128, _round_up(-(-N // 2), 128)))
    tn = max(128, (tn // 128) * 128)
    num_tiles = -(-N // tn)          # cdiv — no divisibility requirement on N
    N_pad = num_tiles * tn

    beta_aug = jnp.concatenate(
        [beta_input.astype(f32), jnp.ones((N, 1), f32)], axis=1)         # (N, P+1)
    beta_pad = jnp.pad(beta_aug, ((0, N_pad - N), (0, Ppad - (P + 1))))  # (N_pad, Ppad)

    out = pl.pallas_call(
        ca_forward_kernel,
        out_shape=jax.ShapeDtypeStruct((1, N_pad), f32),
        grid_spec=pltpu.PrefetchScalarGridSpec(
            num_scalar_prefetch=0,
            grid=(num_tiles,),
            in_specs=[
                pl.BlockSpec((1, Ppad), lambda i: (0, 0)),    # collapsed weights (resident)
                pl.BlockSpec((tn, Ppad), lambda i: (i, 0)),   # streamed beta tile
            ],
            out_specs=pl.BlockSpec((1, tn), lambda i: (0, i)),  # lane-dense slab
        ),
        compiler_params=pltpu.CompilerParams(
            dimension_semantics=("parallel",),
        ),
    )(v_row, beta_pad)

    return out[0, :N]  # (N,) — matches torch.sum(..., dim=1)


def reference_forward(beta_input, factor_input, wb, bb, wf, bf):
    beta_out = beta_input @ wb + bb
    factor_out = factor_input @ wf + bf
    return jnp.sum(beta_out * factor_out, axis=1)


if __name__ == "__main__":
    # Small shapes consistent with the module: N managed portfolios with P
    # characteristics, a single month (1, P) of portfolio returns, K latent factors.
    # N is deliberately NOT a multiple of the tile so the cdiv + padding path and the
    # multi-tile (2-step) grid are exercised.
    N, P, K = 200, 94, 8

    key = jax.random.PRNGKey(0)
    k1, k2, k3, k4, k5, k6 = jax.random.split(key, 6)

    beta_input = jax.random.normal(k1, (N, P), dtype=jnp.float32)
    factor_input = jax.random.normal(k2, (1, P), dtype=jnp.float32)

    # Deterministic synthetic Linear(P, K) weights/biases for ca_beta / ca_factor.
    wb = jax.random.normal(k3, (P, K), dtype=jnp.float32) * 0.05
    bb = jax.random.normal(k4, (1, K), dtype=jnp.float32) * 0.01
    wf = jax.random.normal(k5, (P, K), dtype=jnp.float32) * 0.05
    bf = jax.random.normal(k6, (1, K), dtype=jnp.float32) * 0.01

    out = ca_base_forward(beta_input, factor_input, wb, bb, wf, bf)
    out = jax.block_until_ready(out)

    ref = reference_forward(beta_input, factor_input, wb, bb, wf, bf)
    assert out.shape == (N,)
    assert jnp.allclose(out, ref, atol=1e-4, rtol=1e-4), "mismatch vs JAX reference"

    # TODO(synk): training / data-loading methods of CA_base_wyh are host-side and
    # intentionally not translated; only the forward pass is implemented.
    print("KERNEL_OK")
</pallas_src>

<mosaic_0001>
module attributes {stable_mosaic.version = 11 : i64} {
  func.func @ca_forward_kernel(%arg0: i32, %arg1: memref<1x128xf32, #tpu.memory_space<vmem>>, %arg2: memref<128x128xf32, #tpu.memory_space<vmem>>, %arg3: memref<1x128xf32, #tpu.memory_space<vmem>>) attributes {dimension_semantics = [#tpu.dimension_semantics<parallel>], iteration_bounds = array<i64: 2>, scalar_prefetch = 0 : i64, scratch_operands = 0 : i64, tpu.core_type = #tpu.core_type<tc>, window_params = [{pipeline_mode = #tpu.pipeline_mode<synchronous>, transform_indices = @transform_0, window_bounds = array<i64: 1, 128>}, {transform_indices = @transform_1, window_bounds = array<i64: 128, 128>}, {transform_indices = @transform_2, window_bounds = array<i64: 1, 128>}]} {
    %c0 = arith.constant 0 : index
    %c0_0 = arith.constant 0 : index
    %0 = vector.load %arg1[%c0, %c0_0] : memref<1x128xf32, #tpu.memory_space<vmem>>, vector<1x128xf32>
    %c0_1 = arith.constant 0 : index
    %c0_2 = arith.constant 0 : index
    %1 = vector.load %arg2[%c0_1, %c0_2] : memref<128x128xf32, #tpu.memory_space<vmem>>, vector<128x128xf32>
    %cst = arith.constant dense<0.000000e+00> : vector<1x128xf32>
    %2 = tpu.matmul %0, %1, %cst {dimension_numbers = #tpu.dot_dimension_numbers<[1], [1], [0], [0], [0, 0, 1, 0], [], []>} : vector<1x128xf32>, vector<128x128xf32>, vector<1x128xf32> -> vector<1x128xf32>
    %c0_3 = arith.constant 0 : index
    %c0_4 = arith.constant 0 : index
    %3 = vector.load %arg3[%c0_3, %c0_4] : memref<1x128xf32, #tpu.memory_space<vmem>>, vector<1x128xf32>
    tpu.vector_store %arg3[%c0_3, %c0_4], %2 {strides = array<i32>} : memref<1x128xf32, #tpu.memory_space<vmem>>, vector<1x128xf32>,
    return
  }
  func.func @transform_0(%arg0: i32) -> (i32, i32) {
    %c0_i32 = arith.constant 0 : i32
    %c0_i32_0 = arith.constant 0 : i32
    %c0_i32_1 = arith.constant 0 : i32
    return %c0_i32, %c0_i32_0 : i32, i32
  }
  func.func @transform_1(%arg0: i32) -> (i32, i32) {
    %c0_i32 = arith.constant 0 : i32
    %c0_i32_0 = arith.constant 0 : i32
    return %arg0, %c0_i32 : i32, i32
  }
  func.func @transform_2(%arg0: i32) -> (i32, i32) {
    %c0_i32 = arith.constant 0 : i32
    %c0_i32_0 = arith.constant 0 : i32
    return %c0_i32, %arg0 : i32, i32
  }
}

</mosaic_0001>

<llo_original>
// kernel: tpu_custom_call.1
$region0: #{tpu_custom_call.1}
  #allocation0 [shape = 'u32[]', space=smem, size = 0x4, offset = 0x4, fixed_abs, tag = 'smem constant byte address 0x4 - core index']
  #allocation1 [shape = 'u32[144,128]{1,0:T(1,128)}', space=vmem, size = 0x12000, scoped, tag = 'internal scratch']
  %s0 = inlined_call_operand.hbm [shape: f32[1,128], index: 0, kind: input, shape index: {}]
  %s1 = inlined_call_operand.hbm [shape: f32[256,128], index: 1, kind: input, shape index: {}]
  %s2 = inlined_call_operand.hbm [shape: f32[1,256], index: 2, kind: output, shape index: {}]
  %s3 = sld [smem:[#allocation0]]
  $region49: #{tpu_custom_call.1} parent=0
    _
  %s5 = ssub.s32 1, %s3
  %s6 = scalar_select 0, %s5, %s3
  $region1: #{tpu_custom_call.1} parent=0
    #allocation2 [shape = 'u8[512]{0}', space=vmem, size = 0x400, scoped, tag = 'input window, operand 0, single buffered']
    #allocation3 [shape = 's32[2]{0}', space=sflag, size = 0x8, scoped, tag = 'scoped memory for tpu_custom_call.1']
    #allocation4 [shape = 's32[2]{0}', space=sflag, size = 0x8, scoped, tag = 'scoped memory for tpu_custom_call.1']
    #allocation5 [shape = 'u8[131072]{0}', space=vmem, size = 0x20000, scoped, tag = 'input window, operand 1']
    #allocation6 [shape = 's32[2]{0}', space=sflag, size = 0x8, scoped, tag = 'scoped memory for tpu_custom_call.1']
    #allocation7 [shape = 'u8[1024]{0}', space=vmem, size = 0x400, scoped, tag = 'output window, operand 0']
    %7 = vsyncpa [#allocation3], 0
    %8 = vsyncpa [#allocation6], 0
    %s9 = scalar_lea.sflag [#allocation6], 1
    %10 = vsyncpa %s9, 0
    %11 = vsyncpa [#allocation4], 0
    %s12 = scalar_lea.sflag [#allocation4], 1
    %13 = vsyncpa %s12, 0
    loop: start=0, step=1, limit=4
    $region2: #{tpu_custom_call.1} parent=1 // loop_pre_header
      _
    $region3: #{tpu_custom_call.1} parent=1 // loop_header
      %s15 = sphi 0, %s19
      %p16 = scmp.ge.s32.totalorder %s15, 4
      %s23 = sphi 0, %s23
      %s25 = sphi 0, %s23
      %s26 = sphi 0, %s25
      %s40 = sphi 0, %s26
      %s46 = sphi 0, %s48
      %s49 = sphi 0, %s46
      %s50 = sphi 0, %s49
      %s66 = sphi 0, %s50
      %s72 = sphi 0, %s74
      %s75 = sphi 0, %s72
      %s76 = sphi 0, %s75
      %s92 = sphi 0, %s76
    $region4: #{tpu_custom_call.1} parent=1 // loop_header_branch
      %18 = sbr.rel (%p16) target = $region8
    $region5: #{tpu_custom_call.1} parent=1 // loop_body
      %s20 = ssub.s32 %s15, 1
      %s21 = ssub.s32 %s15, 2
      %s22 = sadd.s32 %s15, 1
      %s24 = sadd.s32 %s23, 1
      %p27 = scmp.eq.s32.totalorder %s15, 1
      %p28 = scmp.ne.s32.totalorder %s23, %s25
      %p29 = scmp.eq.s32.totalorder %s15, 0
      %p30 = por %p28, %p29
      %p31 = scmp.ne.s32.totalorder %s23, %s25
      %p32 = scmp.eq.s32.totalorder %s20, 1
      %p33 = por %p31, %p32
      %p34 = scmp.ne.s32.totalorder %s25, %s26
      %p35 = scmp.eq.s32.totalorder %s20, 0
      %p36 = por %p34, %p35
      %p37 = scmp.ne.s32.totalorder %s25, %s26
      %p38 = scmp.eq.s32.totalorder %s21, 1
      %p39 = por %p37, %p38
      %p41 = scmp.ne.s32.totalorder %s26, %s40
      %p42 = scmp.eq.s32.totalorder %s21, 0
      %p43 = por %p41, %p42
      %s44 = ssub.s32 %s15, %s22
      %p45 = scmp.eq.s32.totalorder %s44, 0
      %s47 = sadd.s32 %s46, 1
      %s48 = scalar_select %p45, %s46, %s47
      %p51 = pneg %p45
      %p52 = scmp.eq.s32.totalorder %s15, 1
      %p53 = por %p51, %p52
      %p54 = scmp.ne.s32.totalorder %s46, %s49
      %p55 = scmp.eq.s32.totalorder %s15, 0
      %p56 = por %p54, %p55
      %p57 = scmp.ne.s32.totalorder %s46, %s49
      %p58 = scmp.eq.s32.totalorder %s20, 1
      %p59 = por %p57, %p58
      %p60 = scmp.ne.s32.totalorder %s49, %s50
      %p61 = scmp.eq.s32.totalorder %s20, 0
      %p62 = por %p60, %p61
      %p63 = scmp.ne.s32.totalorder %s49, %s50
      %p64 = scmp.eq.s32.totalorder %s21, 1
      %p65 = por %p63, %p64
      %p67 = scmp.ne.s32.totalorder %s50, %s66
      %p68 = scmp.eq.s32.totalorder %s21, 0
      %p69 = por %p67, %p68
      %s70 = ssub.s32 %s15, %s22
      %p71 = scmp.eq.s32.totalorder %s70, 0
      %s73 = sadd.s32 %s72, 1
      %s74 = scalar_select %p71, %s72, %s73
      %p77 = pneg %p71
      %p78 = scmp.eq.s32.totalorder %s15, 1
      %p79 = por %p77, %p78
      %p80 = scmp.ne.s32.totalorder %s72, %s75
      %p81 = scmp.eq.s32.totalorder %s15, 0
      %p82 = por %p80, %p81
      %p83 = scmp.ne.s32.totalorder %s72, %s75
      %p84 = scmp.eq.s32.totalorder %s20, 1
      %p85 = por %p83, %p84
      %p86 = scmp.ne.s32.totalorder %s75, %s76
      %p87 = scmp.eq.s32.totalorder %s20, 0
      %p88 = por %p86, %p87
      %p89 = scmp.ne.s32.totalorder %s75, %s76
      %p90 = scmp.eq.s32.totalorder %s21, 1
      %p91 = por %p89, %p90
      %p93 = scmp.ne.s32.totalorder %s76, %s92
      %p94 = scmp.eq.s32.totalorder %s21, 0
      %p95 = por %p93, %p94
      %p96 = scmp.le.s32.totalorder 1, %s15
      %p97 = scmp.lt.s32.totalorder %s15, 3
      %p98 = pnand %p96, %p97
      %p99 = pneg %p98
      // Predicated region
      $region9: #{tpu_custom_call.1} parent=5 // pred_check
        _
      $region10: #{tpu_custom_call.1} parent=5 // pred_check_branch
        %101 = sbr.rel (%p98) target = $region12
      $region11: #{tpu_custom_call.1} parent=5 // pred_region
        %s102 = ssub.s32 %s15, 1
        // Predicated region
        $region13: #{tpu_custom_call.1} parent=11 // pred_check
          %p103 = pneg %p36
        $region14: #{tpu_custom_call.1} parent=11 // pred_check_branch
          %105 = sbr.rel (%p103) target = $region16
        $region15: #{tpu_custom_call.1} parent=11 // pred_region
          %s107 = ssub.s32 16, 16
          %108 = vsyncadd [#allocation3], %s107
          %s110 = sshll.u32 [#allocation2], 4
          %s111 = int_to_ptr.vmem [resolvable:$true] %s110
          %113 = dma.hbm_to_vmem [thread:$0]  %s0, 16, %s111, [#allocation3]
        $region16: #{tpu_custom_call.1} parent=11 // pred_fallthru
          _
      $region12: #{tpu_custom_call.1} parent=5 // pred_fallthru
        _
      %p114 = scmp.lt.s32.totalorder %s15, 2
      // Predicated region
      $region17: #{tpu_custom_call.1} parent=5 // pred_check
        %p115 = pneg %p114
      $region18: #{tpu_custom_call.1} parent=5 // pred_check_branch
        %117 = sbr.rel (%p115) target = $region20
      $region19: #{tpu_custom_call.1} parent=5 // pred_region
        // Predicated region
        $region21: #{tpu_custom_call.1} parent=19 // pred_check
          %p118 = pneg %p56
        $region22: #{tpu_custom_call.1} parent=19 // pred_check_branch
          %120 = sbr.rel (%p118) target = $region24
        $region23: #{tpu_custom_call.1} parent=19 // pred_region
          %s121 = sand.u32 %s46, 1
          %s122 = scalar_lea.sflag [#allocation6], %s121
          %s123 = sand.u32 %s46, 1
          %s124 = smul.addr %s123, 128
          %s125 = scalar_lea.vmem [#allocation5], %s124
          %s126 = smul.u32 16, %s15
          %s128 = ssub.s32 2048, 2048
          %129 = vsyncadd %s122, %s128
          %s130 = smul.addr %s126, 128
          %s131 = scalar_lea.hbm %s1, %s130
          %s132 = sshll.u32 %s125, 4
          %s133 = int_to_ptr.vmem [resolvable:$true] %s132
          %138 = dma.hbm_to_vmem [thread:$0]  %s131, 2048, %s133, %s122, 128, 128, 8
        $region24: #{tpu_custom_call.1} parent=19 // pred_fallthru
          _
      $region20: #{tpu_custom_call.1} parent=5 // pred_fallthru
        _
      %p139 = scmp.le.s32.totalorder 1, %s15
      %p140 = scmp.lt.s32.totalorder %s15, 3
      %p141 = pnand %p139, %p140
      %p142 = pneg %p141
      // Predicated region
      $region25: #{tpu_custom_call.1} parent=5 // pred_check
        _
      $region26: #{tpu_custom_call.1} parent=5 // pred_check_branch
        %144 = sbr.rel (%p141) target = $region28
      $region27: #{tpu_custom_call.1} parent=5 // pred_region
        %s145 = ssub.s32 %s15, 1
        // Predicated region
        $region29: #{tpu_custom_call.1} parent=27 // pred_check
          %p146 = pneg %p36
        $region30: #{tpu_custom_call.1} parent=27 // pred_check_branch
          %148 = sbr.rel (%p146) target = $region32
        $region31: #{tpu_custom_call.1} parent=27 // pred_region
          %149 = dma.done [#allocation3], 16
        $region32: #{tpu_custom_call.1} parent=27 // pred_fallthru
          _
        %s150 = sand.u32 %s49, 1
        %s151 = scalar_lea.sflag [#allocation6], %s150
        %s152 = sand.u32 %s49, 1
        %s153 = smul.addr %s152, 128
        %s154 = scalar_lea.vmem [#allocation5], %s153
        // Predicated region
        $region33: #{tpu_custom_call.1} parent=27 // pred_check
          %p155 = pneg %p62
        $region34: #{tpu_custom_call.1} parent=27 // pred_check_branch
          %157 = sbr.rel (%p155) target = $region36
        $region35: #{tpu_custom_call.1} parent=27 // pred_region
          %158 = dma.done %s151, 2048
        $region36: #{tpu_custom_call.1} parent=27 // pred_fallthru
          _
        %p159 = pneg %p36
        %p160 = pneg %p33
        %s161 = sand.u32 %s49, 1
        %s162 = scalar_lea.sflag [#allocation6], %s161
        %s163 = sand.u32 %s49, 1
        %s164 = smul.addr %s163, 128
        %s165 = scalar_lea.vmem [#allocation5], %s164
        %p166 = pneg %p62
        %p167 = pneg %p59
        %p168 = pneg %p88
        %p169 = pneg %p85
        %s170 = sand.u32 %s75, 1
        %s171 = scalar_lea.sflag [#allocation4], %s170
        %s172 = sand.u32 %s75, 1
        %s173 = scalar_lea.vmem [#allocation7], %s172
        %s174 = smul.u32 16, %s20
        %v175 = vld [vmem:[#allocation2] sm:$0x1]
        %v176 = vld [vmem:[%s154] sm:$0xff]
        %v177 = vld [vmem:[%s154 + $0x8] sm:$0xff]
        %v178 = vld [vmem:[%s154 + $0x10] sm:$0xff]
        %v179 = vld [vmem:[%s154 + $0x18] sm:$0xff]
        %v180 = vld [vmem:[%s154 + $0x20] sm:$0xff]
        %v181 = vld [vmem:[%s154 + $0x28] sm:$0xff]
        %v182 = vld [vmem:[%s154 + $0x30] sm:$0xff]
        %v183 = vld [vmem:[%s154 + $0x38] sm:$0xff]
        %v184 = vld [vmem:[%s154 + $0x40] sm:$0xff]
        %v185 = vld [vmem:[%s154 + $0x48] sm:$0xff]
        %v186 = vld [vmem:[%s154 + $0x50] sm:$0xff]
        %v187 = vld [vmem:[%s154 + $0x58] sm:$0xff]
        %v188 = vld [vmem:[%s154 + $0x60] sm:$0xff]
        %v189 = vld [vmem:[%s154 + $0x68] sm:$0xff]
        %v190 = vld [vmem:[%s154 + $0x70] sm:$0xff]
        %v191 = vld [vmem:[%s154 + $0x78] sm:$0xff]
        %192 = vmatprep.subr.mxu0 0.0
        %193 = vmatpush1.xpose.msra.mxu0 %v176
        %194 = vmatprep.subr.mxu0 0.0
        %195 = vmatpush1.xpose.msra.mxu0 %v177
        %196 = vmatprep.subr.mxu0 0.0
        %197 = vmatpush1.xpose.msra.mxu0 %v178
        %198 = vmatprep.subr.mxu0 0.0
        %199 = vmatpush1.xpose.msra.mxu0 %v179
        %200 = vmatprep.subr.mxu0 0.0
        %201 = vmatpush1.xpose.msra.mxu0 %v180
        %202 = vmatprep.subr.mxu0 0.0
        %203 = vmatpush1.xpose.msra.mxu0 %v181
        %204 = vmatprep.subr.mxu0 0.0
        %205 = vmatpush1.xpose.msra.mxu0 %v182
        %206 = vmatprep.subr.mxu0 0.0
        %207 = vmatpush1.xpose.msra.mxu0 %v183
        %208 = vmatprep.subr.mxu0 0.0
        %209 = vmatpush1.xpose.msra.mxu0 %v184
        %210 = vmatprep.subr.mxu0 0.0
        %211 = vmatpush1.xpose.msra.mxu0 %v185
        %212 = vmatprep.subr.mxu0 0.0
        %213 = vmatpush1.xpose.msra.mxu0 %v186
        %214 = vmatprep.subr.mxu0 0.0
        %215 = vmatpush1.xpose.msra.mxu0 %v187
        %216 = vmatprep.subr.mxu0 0.0
        %217 = vmatpush1.xpose.msra.mxu0 %v188
        %218 = vmatprep.subr.mxu0 0.0
        %219 = vmatpush1.xpose.msra.mxu0 %v189
        %220 = vmatprep.subr.mxu0 0.0
        %221 = vmatpush1.xpose.msra.mxu0 %v190
        %222 = vmatprep.subr.mxu0 0.0
        %223 = vmatpush1.xpose.msra.mxu0 %v191
        %224 = vmatprep.subr.mxu0 0.0
        %225 = vmatpush1.xpose.msra.mxu0 0.0
        %226 = vmatprep.subr.mxu0 0.0
        %227 = vmatpush1.xpose.msra.mxu0 0.0
        %228 = vmatprep.subr.mxu0 0.0
        %229 = vmatpush1.xpose.msra.mxu0 0.0
        %230 = vmatprep.subr.mxu0 0.0
        %231 = vmatpush1.xpose.msra.mxu0 0.0
        %232 = vmatprep.subr.mxu0 0.0
        %233 = vmatpush1.xpose.msra.mxu0 0.0
        %234 = vmatprep.subr.mxu0 0.0
        %235 = vmatpush1.xpose.msra.mxu0 0.0
        %236 = vmatprep.subr.mxu0 0.0
        %237 = vmatpush1.xpose.msra.mxu0 0.0
        %238 = vmatprep.subr.mxu0 0.0
        %239 = vmatpush1.xpose.msra.mxu0 0.0
        %240 = vmatprep.subr.mxu0 0.0
        %241 = vmatpush1.xpose.msra.mxu0 0.0
        %242 = vmatprep.subr.mxu0 0.0
        %243 = vmatpush1.xpose.msra.mxu0 0.0
        %244 = vmatprep.subr.mxu0 0.0
        %245 = vmatpush1.xpose.msra.mxu0 0.0
        %246 = vmatprep.subr.mxu0 0.0
        %247 = vmatpush1.xpose.msra.mxu0 0.0
        %248 = vmatprep.subr.mxu0 0.0
        %249 = vmatpush1.xpose.msra.mxu0 0.0
        %250 = vmatprep.subr.mxu0 0.0
        %251 = vmatpush1.xpose.msra.mxu0 0.0
        %252 = vmatprep.subr.mxu0 0.0
        %253 = vmatpush1.xpose.msra.mxu0 0.0
        %254 = vmatprep.subr.mxu0 0.0
        %255 = vmatpush1.xpose.msra.mxu0 0.0
        %256 = vmatprep.mubr.f32.mxu0 0.0
        %257 = vmatmul.mubr.f32.gmra.mrb[0].mxu0 %v175
        %v258 = vpop.f32.mrb[0].mxu0
        %v259 = vadd.f32 0.0, %v258
        %v260 = vpop.f32.mrb[0].mxu0
        %261 = vdwg.mxu0
        %262 = vst [vmem:[%s173] sm:$0x1] %v259
        %s263 = sand.u32 %s75, 1
        %s264 = scalar_lea.sflag [#allocation4], %s263
        %s265 = sand.u32 %s75, 1
        %s266 = scalar_lea.vmem [#allocation7], %s265
        // Predicated region
        $region37: #{tpu_custom_call.1} parent=27 // pred_check
          %p267 = pneg %p85
        $region38: #{tpu_custom_call.1} parent=27 // pred_check_branch
          %269 = sbr.rel (%p267) target = $region40
        $region39: #{tpu_custom_call.1} parent=27 // pred_region
          %s271 = ssub.s32 16, 16
          %272 = vsyncadd %s264, %s271
          %s273 = smul.addr %s20, 16
          %s274 = scalar_lea.hbm %s2, %s273
          %s276 = sshll.u32 %s266, 4
          %s277 = int_to_ptr.vmem [resolvable:$true] %s276
          %279 = dma.vmem_to_hbm [thread:$0]  %s277, 16, %s274, %s264
        $region40: #{tpu_custom_call.1} parent=27 // pred_fallthru
          _
      $region28: #{tpu_custom_call.1} parent=5 // pred_fallthru
        _
      %p280 = scmp.le.s32.totalorder 2, %s15
      // Predicated region
      $region41: #{tpu_custom_call.1} parent=5 // pred_check
        %p281 = pneg %p280
      $region42: #{tpu_custom_call.1} parent=5 // pred_check_branch
        %283 = sbr.rel (%p281) target = $region44
      $region43: #{tpu_custom_call.1} parent=5 // pred_region
        %s284 = ssub.s32 %s15, 2
        // Predicated region
        $region45: #{tpu_custom_call.1} parent=43 // pred_check
          %p285 = pneg %p91
        $region46: #{tpu_custom_call.1} parent=43 // pred_check_branch
          %287 = sbr.rel (%p285) target = $region48
        $region47: #{tpu_custom_call.1} parent=43 // pred_region
          %s288 = sand.u32 %s76, 1
          %s289 = scalar_lea.sflag [#allocation4], %s288
          %s290 = sand.u32 %s76, 1
          %s291 = scalar_lea.vmem [#allocation7], %s290
          %292 = dma.done %s289, 16
        $region48: #{tpu_custom_call.1} parent=43 // pred_fallthru
          _
      $region44: #{tpu_custom_call.1} parent=5 // pred_fallthru
        _
    $region6: #{tpu_custom_call.1} parent=1 // loop_footer
      %s19 = sadd.s32 1, %s15
    $region7: #{tpu_custom_call.1} parent=1 // loop_footer_branch
      %14 = sbr.rel target = $region3
    $region8: #{tpu_custom_call.1} parent=1 // loop_exit
      _
    %293 = vsyncpa [#allocation3], 1
    %s294 = scalar_lea.sflag [#allocation3], 1
    %295 = vsyncpa %s294, 1
    %296 = vsyncpa [#allocation6], 1
    %s297 = scalar_lea.sflag [#allocation6], 1
    %298 = vsyncpa %s297, 1
    %299 = vsyncpa [#allocation4], 1
    %s300 = scalar_lea.sflag [#allocation4], 1
    %301 = vsyncpa %s300, 1

</llo_original>
